<compile_context>
chip_gen: v7x
topology: tpu7x:2x2x1
jax: 0.10.0
libtpu: 0.0.40
codegen_flags: <defaults>
</compile_context>

<pallas_src>
import jax
import jax.numpy as jnp
from jax.experimental import pallas as pl
from jax.experimental.pallas import tpu as pltpu


def _spatial_exchange_kernel(mask_ref, x1_ref, x2_ref, o1_ref, o2_ref):
    # mask_ref: (1, L) int32, VMEM-resident across grid steps (constant index_map).
    x1 = x1_ref[...]
    x2 = x2_ref[...]
    # Hoist the compare + sublane broadcast once; reuse it for both selects
    # (JAX does not CSE broadcast_in_dim).
    m = jnp.broadcast_to(mask_ref[...] != 0, x1.shape)
    o1_ref[...] = jnp.where(m, x2, x1)  # exchanged columns take the other input
    o2_ref[...] = jnp.where(m, x1, x2)


def _ceil_div(a, b):
    return -(-a // b)


def _divisors(n):
    out = set()
    d = 1
    while d * d <= n:
        if n % d == 0:
            out.add(d)
            out.add(n // d)
        d += 1
    return sorted(out)


def _target_block_bytes():
    """Per-array, per-block byte target by TPU generation (pure HBM streaming)."""
    kind = ""
    try:
        kind = jax.devices()[0].device_kind.lower()
    except Exception:
        pass
    if "v7" in kind or "tpu7" in kind:
        return 3 << 20   # fast HBM -> per-grid-step overhead is a bigger fraction
    if "v5" in kind:
        return 1 << 20   # step overhead already <8% of a ~5 us block move
    return 2 << 20       # v6e and unknown


def _choose_layout(rows, W, dtype_bytes, target_block_bytes,
                   max_lane=8192, min_block_bytes=256 << 10):
    """Pick (fold factor k, lane width L, folded rows, row tile tr)."""
    sublane_mult = max(8, 32 // dtype_bytes)  # 8 f32 / 16 bf16 / 32 int8

    # Fold factor: any divisor of rows; prefer a 128-aligned lane width, then
    # keeping at least one full sublane tile of folded rows, then wider lanes.
    best_score, best_k = None, 1
    for k in _divisors(rows):
        L = k * W
        if L > max_lane:
            continue
        rows2 = rows // k
        score = (L % 128 == 0, rows2 >= sublane_mult, L)
        if best_score is None or score > best_score:
            best_score, best_k = score, k
    k = best_k
    L = k * W
    rows2 = rows // k

    # Row tile sized for ~target_block_bytes per array per block.
    row_bytes = L * dtype_bytes
    if rows2 <= sublane_mult:
        tr = rows2  # block equals full array extent -> always a legal BlockSpec
    else:
        tr = (target_block_bytes // row_bytes) // sublane_mult * sublane_mult
        tr = max(sublane_mult, min(tr, rows2))

        # Megacore grid shaping: aim for >= 8 even steps on the "parallel" axis,
        # but never shrink a block below min_block_bytes.
        def ok(t):
            return t >= sublane_mult and t * row_bytes >= min_block_bytes

        steps = _ceil_div(rows2, tr)
        while steps < 8:
            nt = (tr // 2) // sublane_mult * sublane_mult
            if nt == tr or not ok(nt):
                break
            tr = nt
            steps = _ceil_div(rows2, tr)
        if steps > 1 and steps % 2 == 1:
            nt = _ceil_div(_ceil_div(rows2, steps + 1), sublane_mult) * sublane_mult
            if ok(nt) and nt <= rows2 and _ceil_div(rows2, nt) % 2 == 0:
                tr = nt

    return k, L, rows2, tr


def spatial_exchange(x1, x2, p=0.5, donate_inputs=False):
    """Pallas TPU implementation of SpatialExchange.forward.

    x1, x2: (N, C, H, W) arrays of identical shape/dtype.
    Returns (out_x1, out_x2) with the same shape/dtype.
    Set donate_inputs=True only when the caller no longer needs x1/x2 (e.g.
    inside a jit with donated args): the outputs then alias the inputs, halving
    peak HBM allocation (HBM traffic is unchanged).
    """
    assert x1.shape == x2.shape and x1.dtype == x2.dtype
    assert 0 < p <= 1
    p_int = int(1 / p)  # faithful to the PyTorch module (float truncation)

    N, C, H, W = x1.shape
    if p_int == 1:
        # Every column is exchanged -> pure swap, no kernel / no extra HBM traffic.
        return x2, x1

    rows = N * C * H
    dtype_bytes = jnp.dtype(x1.dtype).itemsize
    k, L, rows2, tr = _choose_layout(rows, W, dtype_bytes, _target_block_bytes())

    # Lane-dense 2D views: NCHW is contiguous with W last, so reshaping to
    # (rows2, k*W) places k consecutive width-rows side by side on the lane
    # axis; the exchange mask is W-periodic along that axis (L = k*W).
    x1_2d = x1.reshape(rows2, L)
    x2_2d = x2.reshape(rows2, L)
    mask_row = (((jnp.arange(L, dtype=jnp.int32) % W) % p_int) == 0)
    mask_row = mask_row.astype(jnp.int32).reshape(1, L)

    grid = (_ceil_div(rows2, tr),)
    data_spec = pl.BlockSpec((tr, L), lambda i: (i, 0))
    mask_spec = pl.BlockSpec((1, L), lambda i: (0, 0))  # resident, no re-DMA

    # Live VMEM: 2 inputs + 2 outputs, double-buffered, plus the resident mask.
    block_bytes = tr * L * dtype_bytes
    vmem_limit = 8 * block_bytes + 2 * L * 4 + (4 << 20)          # + headroom
    vmem_limit = max(16 << 20, min(vmem_limit, 48 << 20))         # v7x: 64 MiB phys

    extra = {}
    if donate_inputs:
        extra["input_output_aliases"] = {1: 0, 2: 1}  # x1 -> out1, x2 -> out2

    out1_2d, out2_2d = pl.pallas_call(
        _spatial_exchange_kernel,
        out_shape=(
            jax.ShapeDtypeStruct((rows2, L), x1.dtype),
            jax.ShapeDtypeStruct((rows2, L), x2.dtype),
        ),
        grid_spec=pltpu.PrefetchScalarGridSpec(
            num_scalar_prefetch=0,
            grid=grid,
            in_specs=[mask_spec, data_spec, data_spec],
            out_specs=[data_spec, data_spec],
        ),
        compiler_params=pltpu.CompilerParams(
            # Single row-tile axis; "parallel" lets v7x shard it across both TCs.
            dimension_semantics=("parallel",),
            vmem_limit_bytes=vmem_limit,
        ),
        **extra,
    )(mask_row, x1_2d, x2_2d)

    return out1_2d.reshape(N, C, H, W), out2_2d.reshape(N, C, H, W)


def _reference(x1, x2, p=0.5):
    """Pure-JAX reference mirroring the PyTorch forward."""
    p_int = int(1 / p)
    W = x1.shape[-1]
    mask = (jnp.arange(W) % p_int) == 0
    out1 = jnp.where(mask, x2, x1)
    out2 = jnp.where(mask, x1, x2)
    return out1, out2


if __name__ == "__main__":
    key = jax.random.PRNGKey(0)
    k1, k2, k3, k4 = jax.random.split(key, 4)

    # Case 1: module-default p = 1/2 on the nominal small shape.
    N, C, H, W = 2, 4, 16, 16
    x1 = jax.random.normal(k1, (N, C, H, W), dtype=jnp.float32)
    x2 = jax.random.normal(k2, (N, C, H, W), dtype=jnp.float32)
    out1, out2 = spatial_exchange(x1, x2, p=0.5)
    jax.block_until_ready((out1, out2))
    ref1, ref2 = _reference(x1, x2, p=0.5)
    assert jnp.array_equal(out1, ref1), "out_x1 mismatch (p=0.5)"
    assert jnp.array_equal(out2, ref2), "out_x2 mismatch (p=0.5)"

    # Case 2: p = 1/4 (different exchange period under column folding).
    out1b, out2b = spatial_exchange(x1, x2, p=0.25)
    jax.block_until_ready((out1b, out2b))
    ref1b, ref2b = _reference(x1, x2, p=0.25)
    assert jnp.array_equal(out1b, ref1b), "out_x1 mismatch (p=0.25)"
    assert jnp.array_equal(out2b, ref2b), "out_x2 mismatch (p=0.25)"

    # Case 3: odd row count and non-128-aligned W (exercises odd-divisor folding).
    y1 = jax.random.normal(k3, (2, 3, 5, 20), dtype=jnp.float32)
    y2 = jax.random.normal(k4, (2, 3, 5, 20), dtype=jnp.float32)
    out1c, out2c = spatial_exchange(y1, y2, p=0.5)
    jax.block_until_ready((out1c, out2c))
    ref1c, ref2c = _reference(y1, y2, p=0.5)
    assert jnp.array_equal(out1c, ref1c), "out_x1 mismatch (odd rows)"
    assert jnp.array_equal(out2c, ref2c), "out_x2 mismatch (odd rows)"

    print("KERNEL_OK")
</pallas_src>

<mosaic_0001>
module attributes {stable_mosaic.version = 11 : i64} {
  func.func @_spatial_exchange_kernel(%arg0: i32, %arg1: memref<1x256xi32, #tpu.memory_space<vmem>>, %arg2: memref<8x256xf32, #tpu.memory_space<vmem>>, %arg3: memref<8x256xf32, #tpu.memory_space<vmem>>, %arg4: memref<8x256xf32, #tpu.memory_space<vmem>>, %arg5: memref<8x256xf32, #tpu.memory_space<vmem>>) attributes {dimension_semantics = [#tpu.dimension_semantics<parallel>], iteration_bounds = array<i64: 1>, scalar_prefetch = 0 : i64, scratch_operands = 0 : i64, tpu.core_type = #tpu.core_type<tc>, window_params = [{pipeline_mode = #tpu.pipeline_mode<synchronous>, transform_indices = @transform_0, window_bounds = array<i64: 1, 256>}, {transform_indices = @transform_1, window_bounds = array<i64: 8, 256>}, {transform_indices = @transform_2, window_bounds = array<i64: 8, 256>}, {transform_indices = @transform_3, window_bounds = array<i64: 8, 256>}, {transform_indices = @transform_4, window_bounds = array<i64: 8, 256>}]} {
    %c0 = arith.constant 0 : index
    %c0_0 = arith.constant 0 : index
    %0 = vector.load %arg2[%c0, %c0_0] : memref<8x256xf32, #tpu.memory_space<vmem>>, vector<8x256xf32>
    %c0_1 = arith.constant 0 : index
    %c0_2 = arith.constant 0 : index
    %1 = vector.load %arg3[%c0_1, %c0_2] : memref<8x256xf32, #tpu.memory_space<vmem>>, vector<8x256xf32>
    %c0_3 = arith.constant 0 : index
    %c0_4 = arith.constant 0 : index
    %2 = vector.load %arg1[%c0_3, %c0_4] : memref<1x256xi32, #tpu.memory_space<vmem>>, vector<1x256xi32>
    %c0_i32 = arith.constant 0 : i32
    %3 = vector.broadcast %c0_i32 : i32 to vector<1x256xi32>
    %4 = arith.cmpi ne, %2, %3 : vector<1x256xi32>
    %5 = vector.shape_cast %4 : vector<1x256xi1> to vector<1x256xi1>
    %6 = vector.broadcast %5 : vector<1x256xi1> to vector<8x256xi1>
    %7 = arith.select %6, %1, %0 : vector<8x256xi1>, vector<8x256xf32>
    %c0_5 = arith.constant 0 : index
    %c0_6 = arith.constant 0 : index
    %8 = vector.load %arg4[%c0_5, %c0_6] : memref<8x256xf32, #tpu.memory_space<vmem>>, vector<8x256xf32>
    tpu.vector_store %arg4[%c0_5, %c0_6], %7 {strides = array<i32>} : memref<8x256xf32, #tpu.memory_space<vmem>>, vector<8x256xf32>,
    %9 = arith.select %6, %0, %1 : vector<8x256xi1>, vector<8x256xf32>
    %c0_7 = arith.constant 0 : index
    %c0_8 = arith.constant 0 : index
    %10 = vector.load %arg5[%c0_7, %c0_8] : memref<8x256xf32, #tpu.memory_space<vmem>>, vector<8x256xf32>
    tpu.vector_store %arg5[%c0_7, %c0_8], %9 {strides = array<i32>} : memref<8x256xf32, #tpu.memory_space<vmem>>, vector<8x256xf32>,
    return
  }
  func.func @transform_0(%arg0: i32) -> (i32, i32) {
    %c0_i32 = arith.constant 0 : i32
    %c0_i32_0 = arith.constant 0 : i32
    %c0_i32_1 = arith.constant 0 : i32
    return %c0_i32, %c0_i32_0 : i32, i32
  }
  func.func @transform_1(%arg0: i32) -> (i32, i32) {
    %c0_i32 = arith.constant 0 : i32
    %c0_i32_0 = arith.constant 0 : i32
    return %arg0, %c0_i32 : i32, i32
  }
  func.func @transform_2(%arg0: i32) -> (i32, i32) {
    %c0_i32 = arith.constant 0 : i32
    %c0_i32_0 = arith.constant 0 : i32
    return %arg0, %c0_i32 : i32, i32
  }
  func.func @transform_3(%arg0: i32) -> (i32, i32) {
    %c0_i32 = arith.constant 0 : i32
    %c0_i32_0 = arith.constant 0 : i32
    return %arg0, %c0_i32 : i32, i32
  }
  func.func @transform_4(%arg0: i32) -> (i32, i32) {
    %c0_i32 = arith.constant 0 : i32
    %c0_i32_0 = arith.constant 0 : i32
    return %arg0, %c0_i32 : i32, i32
  }
}

</mosaic_0001>

<llo_original>
// kernel: tpu_custom_call.1
$region0: #{tpu_custom_call.1}
  #allocation0 [shape = 'u32[]', space=smem, size = 0x4, offset = 0x4, fixed_abs, tag = 'smem constant byte address 0x4 - core index']
  #allocation1 [shape = 'u32[144,128]{1,0:T(1,128)}', space=vmem, size = 0x12000, scoped, tag = 'internal scratch']
  %s0 = inlined_call_operand.hbm [shape: s32[1,256], index: 0, kind: input, shape index: {}]
  %s1 = inlined_call_operand.hbm [shape: f32[8,256], index: 1, kind: input, shape index: {}]
  %s2 = inlined_call_operand.hbm [shape: f32[8,256], index: 2, kind: input, shape index: {}]
  %s3 = inlined_call_operand.hbm [shape: f32[8,256], index: 3, kind: output, shape index: {0}]
  %s4 = inlined_call_operand.hbm [shape: f32[8,256], index: 4, kind: output, shape index: {1}]
  %5 = xla_tuple %s3, %s4
  %s6 = sld [smem:[#allocation0]]
  $region42: #{tpu_custom_call.1} parent=0
    _
  %s8 = ssub.s32 1, %s6
  %s9 = scalar_select 0, %s8, %s6
  $region1: #{tpu_custom_call.1} parent=0
    #allocation2 [shape = 'u8[1024]{0}', space=vmem, size = 0x400, scoped, tag = 'input window, operand 0, single buffered']
    #allocation3 [shape = 's32[1]{0}', space=sflag, size = 0x4, scoped, tag = 'scoped memory for tpu_custom_call.1']
    #allocation4 [shape = 's32[1]{0}', space=sflag, size = 0x4, scoped, tag = 'scoped memory for tpu_custom_call.1']
    #allocation5 [shape = 'u8[8192]{0}', space=vmem, size = 0x2000, scoped, tag = 'input window, operand 1, single buffered']
    #allocation6 [shape = 's32[1]{0}', space=sflag, size = 0x4, scoped, tag = 'scoped memory for tpu_custom_call.1']
    #allocation7 [shape = 'u8[8192]{0}', space=vmem, size = 0x2000, scoped, tag = 'input window, operand 2, single buffered']
    #allocation8 [shape = 'u8[8192]{0}', space=vmem, size = 0x2000, scoped, tag = 'output window, operand 0, single buffered']
    #allocation9 [shape = 'u8[8192]{0}', space=vmem, size = 0x2000, scoped, tag = 'output window, operand 1, single buffered']
    #allocation10 [shape = 's32[1]{0}', space=sflag, size = 0x4, scoped, tag = 'scoped memory for tpu_custom_call.1']
    %10 = vsyncpa [#allocation3], 0
    %11 = vsyncpa [#allocation6], 0
    %12 = vsyncpa [#allocation4], 0
    %13 = vsyncpa [#allocation10], 0
    // Predicated region
    $region2: #{tpu_custom_call.1} parent=1 // pred_check
      _
    $region3: #{tpu_custom_call.1} parent=1 // pred_check_branch
      %15 = sbr.rel (0) target = $region5
    $region4: #{tpu_custom_call.1} parent=1 // pred_region
      %s17 = ssub.s32 32, 32
      %18 = vsyncadd [#allocation3], %s17
      %s20 = sshll.u32 [#allocation2], 4
      %s21 = int_to_ptr.vmem [resolvable:$true] %s20
      %23 = dma.hbm_to_vmem [thread:$0]  %s0, 32, %s21, [#allocation3]
    $region5: #{tpu_custom_call.1} parent=1 // pred_fallthru
      _
    // Predicated region
    $region6: #{tpu_custom_call.1} parent=1 // pred_check
      _
    $region7: #{tpu_custom_call.1} parent=1 // pred_check_branch
      %25 = sbr.rel (0) target = $region9
    $region8: #{tpu_custom_call.1} parent=1 // pred_region
      %s27 = ssub.s32 256, 256
      %28 = vsyncadd [#allocation6], %s27
      %s30 = sshll.u32 [#allocation5], 4
      %s31 = int_to_ptr.vmem [resolvable:$true] %s30
      %33 = dma.hbm_to_vmem [thread:$0]  %s1, 256, %s31, [#allocation6]
    $region9: #{tpu_custom_call.1} parent=1 // pred_fallthru
      _
    // Predicated region
    $region10: #{tpu_custom_call.1} parent=1 // pred_check
      _
    $region11: #{tpu_custom_call.1} parent=1 // pred_check_branch
      %35 = sbr.rel (0) target = $region13
    $region12: #{tpu_custom_call.1} parent=1 // pred_region
      %s37 = ssub.s32 256, 256
      %38 = vsyncadd [#allocation6], %s37
      %s40 = sshll.u32 [#allocation7], 4
      %s41 = int_to_ptr.vmem [resolvable:$true] %s40
      %43 = dma.hbm_to_vmem [thread:$0]  %s2, 256, %s41, [#allocation6]
    $region13: #{tpu_custom_call.1} parent=1 // pred_fallthru
      _
    // Predicated region
    $region14: #{tpu_custom_call.1} parent=1 // pred_check
      _
    $region15: #{tpu_custom_call.1} parent=1 // pred_check_branch
      %45 = sbr.rel (0) target = $region17
    $region16: #{tpu_custom_call.1} parent=1 // pred_region
      %46 = dma.done [#allocation3], 32
    $region17: #{tpu_custom_call.1} parent=1 // pred_fallthru
      _
    // Predicated region
    $region18: #{tpu_custom_call.1} parent=1 // pred_check
      _
    $region19: #{tpu_custom_call.1} parent=1 // pred_check_branch
      %48 = sbr.rel (0) target = $region21
    $region20: #{tpu_custom_call.1} parent=1 // pred_region
      %49 = dma.done [#allocation6], 256
    $region21: #{tpu_custom_call.1} parent=1 // pred_fallthru
      _
    // Predicated region
    $region22: #{tpu_custom_call.1} parent=1 // pred_check
      _
    $region23: #{tpu_custom_call.1} parent=1 // pred_check_branch
      %51 = sbr.rel (0) target = $region25
    $region24: #{tpu_custom_call.1} parent=1 // pred_region
      %52 = dma.done [#allocation6], 256
    $region25: #{tpu_custom_call.1} parent=1 // pred_fallthru
      _
    %v53 = vld [vmem:[#allocation5] sm:$0xff]
    %v54 = vld [vmem:[#allocation5 + $0x8] sm:$0xff]
    %v55 = vld [vmem:[#allocation7] sm:$0xff]
    %v56 = vld [vmem:[#allocation7 + $0x8] sm:$0xff]
    %v57 = vld [vmem:[#allocation2] sm:$0x3]
    %vm58 = vcmp.ne.s32.totalorder %v57, 0
    %v59 = vsel %vm58, 1, 0
    %v60 = vlaneseq
    %v61 = vshrl.u32 %v60, 7
    %v62 = vsub.s32 0, %v61
    %v63 = vrot.slane %v59, %v62
    %v64 = vlaneseq
    %v65 = vshrl.u32 %v64, 7
    %v66 = vsub.s32 1, %v65
    %v67 = vrot.slane %v59, %v66
    %vm68 = vcmp.eq.s32.totalorder %v63, 1
    %vm69 = vcmp.eq.s32.totalorder %v67, 1
    %v70 = vsel %vm68, %v55, %v53
    %v71 = vsel %vm69, %v56, %v54
    %72 = vst [vmem:[#allocation8] sm:$0xff] %v70
    %73 = vst [vmem:[#allocation8 + $0x8] sm:$0xff] %v71
    %v74 = vsel %vm68, %v53, %v55
    %v75 = vsel %vm69, %v54, %v56
    %76 = vst [vmem:[#allocation9] sm:$0xff] %v74
    %77 = vst [vmem:[#allocation9 + $0x8] sm:$0xff] %v75
    // Predicated region
    $region26: #{tpu_custom_call.1} parent=1 // pred_check
      _
    $region27: #{tpu_custom_call.1} parent=1 // pred_check_branch
      %79 = sbr.rel (0) target = $region29
    $region28: #{tpu_custom_call.1} parent=1 // pred_region
      %s81 = ssub.s32 256, 256
      %82 = vsyncadd [#allocation4], %s81
      %s84 = sshll.u32 [#allocation8], 4
      %s85 = int_to_ptr.vmem [resolvable:$true] %s84
      %87 = dma.vmem_to_hbm [thread:$0]  %s85, 256, %s3, [#allocation4]
    $region29: #{tpu_custom_call.1} parent=1 // pred_fallthru
      _
    // Predicated region
    $region30: #{tpu_custom_call.1} parent=1 // pred_check
      _
    $region31: #{tpu_custom_call.1} parent=1 // pred_check_branch
      %89 = sbr.rel (0) target = $region33
    $region32: #{tpu_custom_call.1} parent=1 // pred_region
      %s91 = ssub.s32 256, 256
      %92 = vsyncadd [#allocation10], %s91
      %s94 = sshll.u32 [#allocation9], 4
      %s95 = int_to_ptr.vmem [resolvable:$true] %s94
      %97 = dma.vmem_to_hbm [thread:$0]  %s95, 256, %s4, [#allocation10]
    $region33: #{tpu_custom_call.1} parent=1 // pred_fallthru
      _
    // Predicated region
    $region34: #{tpu_custom_call.1} parent=1 // pred_check
      _
    $region35: #{tpu_custom_call.1} parent=1 // pred_check_branch
      %99 = sbr.rel (0) target = $region37
    $region36: #{tpu_custom_call.1} parent=1 // pred_region
      %100 = dma.done [#allocation4], 256
    $region37: #{tpu_custom_call.1} parent=1 // pred_fallthru
      _
    // Predicated region
    $region38: #{tpu_custom_call.1} parent=1 // pred_check
      _
    $region39: #{tpu_custom_call.1} parent=1 // pred_check_branch
      %102 = sbr.rel (0) target = $region41
    $region40: #{tpu_custom_call.1} parent=1 // pred_region
      %103 = dma.done [#allocation10], 256
    $region41: #{tpu_custom_call.1} parent=1 // pred_fallthru
      _
    %104 = vsyncpa [#allocation3], 1
    %105 = vsyncpa [#allocation6], 1
    %106 = vsyncpa [#allocation4], 1
    %107 = vsyncpa [#allocation10], 1

</llo_original>
